<compile_context>
chip_gen: v5e
topology: v5e:2x2
jax: 0.10.0
libtpu: 0.0.40
codegen_flags: <defaults>
</compile_context>

<pallas_src>
import functools
import math

import jax
import jax.numpy as jnp
from jax.experimental import pallas as pl
from jax.experimental.pallas import tpu as pltpu


def _cross_attention_kernel(q_ref, k_ref, v_ref,
                            wq_ref, bq_ref, wk_ref, bk_ref, wv_ref, bv_ref,
                            o_ref, *, num_heads, scale):
    # One grid step == one batch element; heads are batched inside the step.
    _, Lq, Dq = q_ref.shape
    _, Lk, D = k_ref.shape
    hd = D // num_heads

    xq = q_ref[0]                      # (Lq, Dq)
    xk = k_ref[0]                      # (Lk, D)
    xv = v_ref[0]                      # (Lk, D)
    in_dtype = xq.dtype

    # Full-lane-width projections: ONE MXU matmul per tensor (output width D)
    # instead of num_heads head_dim-wide matmuls. Accumulate in f32, add bias.
    q = jnp.dot(xq, wq_ref[...], preferred_element_type=jnp.float32) + bq_ref[...]
    k = jnp.dot(xk, wk_ref[...], preferred_element_type=jnp.float32) + bk_ref[...]
    v = jnp.dot(xv, wv_ref[...], preferred_element_type=jnp.float32) + bv_ref[...]

    # Cast back to the input dtype for the attention matmuls (no-op for f32,
    # bf16 MXU path for bf16 inputs); accumulation stays f32.
    q = q.astype(in_dtype)
    k = k.astype(in_dtype)
    v = v.astype(in_dtype)

    # Split heads onto a LEADING batch axis with static lane slices (cheap,
    # layout-friendly; no lane-dim reshape / transpose).
    def split_heads(x):
        return jnp.stack(
            [x[:, h * hd:(h + 1) * hd] for h in range(num_heads)], axis=0)  # (H, L, hd)

    qh = split_heads(q)
    kh = split_heads(k)
    vh = split_heads(v)

    # Scores: heads batched; contract over head_dim via dimension numbers (no .T).
    scores = jnp.einsum("hqd,hkd->hqk", qh, kh,
                        preferred_element_type=jnp.float32) * scale

    # Numerically stable softmax; denominator reciprocal runs on the EUP.
    scores = scores - jnp.max(scores, axis=-1, keepdims=True)
    p = jnp.exp(scores)
    p = p * pl.reciprocal(jnp.sum(p, axis=-1, keepdims=True), approx=True)

    # TODO(synk): attention_dropout(p=0.1) is identity in eval mode (not applied).

    ctx = jnp.einsum("hqk,hkd->hqd", p.astype(in_dtype), vh,
                     preferred_element_type=jnp.float32)       # (H, Lq, hd) f32

    # Merge heads back onto the lane axis in-register (leading-axis indexing is
    # cheap) and issue ONE lane-dense (Lq, D) store instead of H partial stores.
    merged = jnp.concatenate([ctx[h] for h in range(num_heads)], axis=-1)
    o_ref[0] = merged.astype(o_ref.dtype)


def prepare_params(params):
    """One-time host-side parameter prep (do at param-load time, not per call):
    transpose PyTorch Linear weights (out, in) -> (in, out) so the kernel runs
    plain row-major matmuls; reshape biases to (1, out) for row broadcast."""
    def prep_w(w):                     # (out, in) -> (in, out)
        return jnp.transpose(w, (1, 0))

    def prep_b(b):                     # (out,) -> (1, out)
        return b.reshape(1, -1)

    return {
        "wq": prep_w(params["wq"]), "bq": prep_b(params["bq"]),
        "wk": prep_w(params["wk"]), "bk": prep_b(params["bk"]),
        "wv": prep_w(params["wv"]), "bv": prep_b(params["bv"]),
    }


def cross_attention(query, key, value, prepared, num_heads):
    """query: (B, Lq, Dq); key/value: (B, Lk, Dkv). Requires Dq == Dkv (as the
    PyTorch .view() implicitly does). `prepared` comes from prepare_params()."""
    B, Lq, Dq = query.shape
    _, Lk, Dkv = key.shape
    assert Dq == Dkv, "module's .view() requires query_dim == key_value_dim"
    assert Dkv % num_heads == 0
    scale = Dkv ** (-0.5)    # full-dim scale, exactly as in the PyTorch module

    kernel = functools.partial(_cross_attention_kernel,
                               num_heads=num_heads, scale=scale)

    grid_spec = pltpu.PrefetchScalarGridSpec(
        num_scalar_prefetch=0,
        grid=(B,),
        in_specs=[
            pl.BlockSpec((1, Lq, Dq), lambda b: (b, 0, 0)),     # query
            pl.BlockSpec((1, Lk, Dkv), lambda b: (b, 0, 0)),    # key
            pl.BlockSpec((1, Lk, Dkv), lambda b: (b, 0, 0)),    # value
            pl.BlockSpec((Dq, Dkv), lambda b: (0, 0)),          # Wq^T (in, out)
            pl.BlockSpec((1, Dkv), lambda b: (0, 0)),           # bq
            pl.BlockSpec((Dkv, Dkv), lambda b: (0, 0)),         # Wk^T
            pl.BlockSpec((1, Dkv), lambda b: (0, 0)),           # bk
            pl.BlockSpec((Dkv, Dkv), lambda b: (0, 0)),         # Wv^T
            pl.BlockSpec((1, Dkv), lambda b: (0, 0)),           # bv
        ],
        out_specs=pl.BlockSpec((1, Lq, Dkv), lambda b: (b, 0, 0)),
    )

    return pl.pallas_call(
        kernel,
        out_shape=jax.ShapeDtypeStruct((B, Lq, Dkv), query.dtype),
        grid_spec=grid_spec,
        compiler_params=pltpu.CompilerParams(
            # Batch axis is independent -> megacore sharding across TensorCores.
            dimension_semantics=("parallel",),
            # Larger per-step blocks than the scoped default, under v7x's 64 MiB.
            vmem_limit_bytes=48 * 1024 * 1024,
        ),
    )(query, key, value,
      prepared["wq"], prepared["bq"],
      prepared["wk"], prepared["bk"],
      prepared["wv"], prepared["bv"])


def _reference(query, key, value, params, num_heads):
    """Pure-JAX reference mirroring the PyTorch forward (eval mode)."""
    B, Lq, D = query.shape
    Dkv = params["wq"].shape[0]
    scale = Dkv ** (-0.5)
    hd = D // num_heads

    qp = query @ params["wq"].T + params["bq"]
    kp = key @ params["wk"].T + params["bk"]
    vp = value @ params["wv"].T + params["bv"]

    def split(x):
        b, l, _ = x.shape
        return x.reshape(b, l, num_heads, hd).transpose(0, 2, 1, 3)

    qh, kh, vh = split(qp), split(kp), split(vp)
    scores = jnp.einsum("bhqd,bhkd->bhqk", qh, kh) * scale
    attn = jax.nn.softmax(scores, axis=-1)
    ctx = jnp.einsum("bhqk,bhkd->bhqd", attn, vh)
    return ctx.transpose(0, 2, 1, 3).reshape(B, Lq, D)


if __name__ == "__main__":
    # Small shapes consistent with the module: query_dim == key_value_dim == 32.
    B, Lq, Lk, D, H = 2, 8, 8, 32, 4

    key0 = jax.random.PRNGKey(0)
    keys = jax.random.split(key0, 9)

    query = jax.random.normal(keys[0], (B, Lq, D), jnp.float32)
    key_in = jax.random.normal(keys[1], (B, Lk, D), jnp.float32)
    value = jax.random.normal(keys[2], (B, Lk, D), jnp.float32)

    # Deterministic parameter init (PyTorch Linear shapes: W (out,in), b (out,)).
    bound = 1.0 / math.sqrt(D)
    params = {
        "wq": jax.random.uniform(keys[3], (D, D), jnp.float32, -bound, bound),
        "bq": jax.random.uniform(keys[4], (D,), jnp.float32, -bound, bound),
        "wk": jax.random.uniform(keys[5], (D, D), jnp.float32, -bound, bound),
        "bk": jax.random.uniform(keys[6], (D,), jnp.float32, -bound, bound),
        "wv": jax.random.uniform(keys[7], (D, D), jnp.float32, -bound, bound),
        "bv": jax.random.uniform(keys[8], (D,), jnp.float32, -bound, bound),
    }

    # One-time host-side weight transpose (param-load time, not per call).
    prepared = jax.tree_util.tree_map(jax.block_until_ready,
                                      prepare_params(params))

    out = cross_attention(query, key_in, value, prepared, num_heads=H)
    out = jax.block_until_ready(out)

    ref = _reference(query, key_in, value, params, num_heads=H)
    assert out.shape == (B, Lq, D)
    # Tolerance accounts for the EUP approximate reciprocal in the softmax.
    assert jnp.allclose(out, ref, atol=2e-3, rtol=2e-3), "mismatch vs reference"

    print("KERNEL_OK")
</pallas_src>

<mosaic_0001>
module attributes {stable_mosaic.version = 11 : i64} {
  func.func @_cross_attention_kernel(%arg0: i32, %arg1: memref<1x8x32xf32, #tpu.memory_space<vmem>>, %arg2: memref<1x8x32xf32, #tpu.memory_space<vmem>>, %arg3: memref<1x8x32xf32, #tpu.memory_space<vmem>>, %arg4: memref<32x32xf32, #tpu.memory_space<vmem>>, %arg5: memref<1x32xf32, #tpu.memory_space<vmem>>, %arg6: memref<32x32xf32, #tpu.memory_space<vmem>>, %arg7: memref<1x32xf32, #tpu.memory_space<vmem>>, %arg8: memref<32x32xf32, #tpu.memory_space<vmem>>, %arg9: memref<1x32xf32, #tpu.memory_space<vmem>>, %arg10: memref<1x8x32xf32, #tpu.memory_space<vmem>>) attributes {dimension_semantics = [#tpu.dimension_semantics<parallel>], iteration_bounds = array<i64: 2>, scalar_prefetch = 0 : i64, scratch_operands = 0 : i64, tpu.core_type = #tpu.core_type<tc>, window_params = [{transform_indices = @transform_0, window_bounds = array<i64: 1, 8, 32>}, {transform_indices = @transform_1, window_bounds = array<i64: 1, 8, 32>}, {transform_indices = @transform_2, window_bounds = array<i64: 1, 8, 32>}, {pipeline_mode = #tpu.pipeline_mode<synchronous>, transform_indices = @transform_3, window_bounds = array<i64: 32, 32>}, {pipeline_mode = #tpu.pipeline_mode<synchronous>, transform_indices = @transform_4, window_bounds = array<i64: 1, 32>}, {pipeline_mode = #tpu.pipeline_mode<synchronous>, transform_indices = @transform_5, window_bounds = array<i64: 32, 32>}, {pipeline_mode = #tpu.pipeline_mode<synchronous>, transform_indices = @transform_6, window_bounds = array<i64: 1, 32>}, {pipeline_mode = #tpu.pipeline_mode<synchronous>, transform_indices = @transform_7, window_bounds = array<i64: 32, 32>}, {pipeline_mode = #tpu.pipeline_mode<synchronous>, transform_indices = @transform_8, window_bounds = array<i64: 1, 32>}, {transform_indices = @transform_9, window_bounds = array<i64: 1, 8, 32>}]} {
    %c0 = arith.constant 0 : index
    %c0_0 = arith.constant 0 : index
    %c0_1 = arith.constant 0 : index
    %0 = vector.load %arg1[%c0, %c0_0, %c0_1] : memref<1x8x32xf32, #tpu.memory_space<vmem>>, vector<1x8x32xf32>
    %1 = vector.shape_cast %0 : vector<1x8x32xf32> to vector<8x32xf32>
    %c0_2 = arith.constant 0 : index
    %c0_3 = arith.constant 0 : index
    %c0_4 = arith.constant 0 : index
    %2 = vector.load %arg2[%c0_2, %c0_3, %c0_4] : memref<1x8x32xf32, #tpu.memory_space<vmem>>, vector<1x8x32xf32>
    %3 = vector.shape_cast %2 : vector<1x8x32xf32> to vector<8x32xf32>
    %c0_5 = arith.constant 0 : index
    %c0_6 = arith.constant 0 : index
    %c0_7 = arith.constant 0 : index
    %4 = vector.load %arg3[%c0_5, %c0_6, %c0_7] : memref<1x8x32xf32, #tpu.memory_space<vmem>>, vector<1x8x32xf32>
    %5 = vector.shape_cast %4 : vector<1x8x32xf32> to vector<8x32xf32>
    %c0_8 = arith.constant 0 : index
    %c0_9 = arith.constant 0 : index
    %6 = vector.load %arg4[%c0_8, %c0_9] : memref<32x32xf32, #tpu.memory_space<vmem>>, vector<32x32xf32>
    %cst = arith.constant dense<0.000000e+00> : vector<8x32xf32>
    %7 = tpu.matmul %1, %6, %cst {dimension_numbers = #tpu.dot_dimension_numbers<[1], [0], [0], [1], [0, 0, 1, 1], [], []>} : vector<8x32xf32>, vector<32x32xf32>, vector<8x32xf32> -> vector<8x32xf32>
    %c0_10 = arith.constant 0 : index
    %c0_11 = arith.constant 0 : index
    %8 = vector.load %arg5[%c0_10, %c0_11] : memref<1x32xf32, #tpu.memory_space<vmem>>, vector<1x32xf32>
    %9 = vector.broadcast %8 : vector<1x32xf32> to vector<8x32xf32>
    %10 = arith.addf %7, %9 : vector<8x32xf32>
    %c0_12 = arith.constant 0 : index
    %c0_13 = arith.constant 0 : index
    %11 = vector.load %arg6[%c0_12, %c0_13] : memref<32x32xf32, #tpu.memory_space<vmem>>, vector<32x32xf32>
    %cst_14 = arith.constant dense<0.000000e+00> : vector<8x32xf32>
    %12 = tpu.matmul %3, %11, %cst_14 {dimension_numbers = #tpu.dot_dimension_numbers<[1], [0], [0], [1], [0, 0, 1, 1], [], []>} : vector<8x32xf32>, vector<32x32xf32>, vector<8x32xf32> -> vector<8x32xf32>
    %c0_15 = arith.constant 0 : index
    %c0_16 = arith.constant 0 : index
    %13 = vector.load %arg7[%c0_15, %c0_16] : memref<1x32xf32, #tpu.memory_space<vmem>>, vector<1x32xf32>
    %14 = vector.broadcast %13 : vector<1x32xf32> to vector<8x32xf32>
    %15 = arith.addf %12, %14 : vector<8x32xf32>
    %c0_17 = arith.constant 0 : index
    %c0_18 = arith.constant 0 : index
    %16 = vector.load %arg8[%c0_17, %c0_18] : memref<32x32xf32, #tpu.memory_space<vmem>>, vector<32x32xf32>
    %cst_19 = arith.constant dense<0.000000e+00> : vector<8x32xf32>
    %17 = tpu.matmul %5, %16, %cst_19 {dimension_numbers = #tpu.dot_dimension_numbers<[1], [0], [0], [1], [0, 0, 1, 1], [], []>} : vector<8x32xf32>, vector<32x32xf32>, vector<8x32xf32> -> vector<8x32xf32>
    %c0_20 = arith.constant 0 : index
    %c0_21 = arith.constant 0 : index
    %18 = vector.load %arg9[%c0_20, %c0_21] : memref<1x32xf32, #tpu.memory_space<vmem>>, vector<1x32xf32>
    %19 = vector.broadcast %18 : vector<1x32xf32> to vector<8x32xf32>
    %20 = arith.addf %17, %19 : vector<8x32xf32>
    %21 = vector.extract_strided_slice %10 {offsets = [0, 0], sizes = [8, 8], strides = [1, 1]} : vector<8x32xf32> to vector<8x8xf32>
    %22 = vector.extract_strided_slice %10 {offsets = [0, 8], sizes = [8, 8], strides = [1, 1]} : vector<8x32xf32> to vector<8x8xf32>
    %23 = vector.extract_strided_slice %10 {offsets = [0, 16], sizes = [8, 8], strides = [1, 1]} : vector<8x32xf32> to vector<8x8xf32>
    %24 = vector.extract_strided_slice %10 {offsets = [0, 24], sizes = [8, 8], strides = [1, 1]} : vector<8x32xf32> to vector<8x8xf32>
    %25 = vector.shape_cast %21 : vector<8x8xf32> to vector<1x8x8xf32>
    %26 = vector.shape_cast %22 : vector<8x8xf32> to vector<1x8x8xf32>
    %27 = vector.shape_cast %23 : vector<8x8xf32> to vector<1x8x8xf32>
    %28 = vector.shape_cast %24 : vector<8x8xf32> to vector<1x8x8xf32>
    %29 = tpu.concatenate %25, %26, %27, %28 in 0 : vector<1x8x8xf32>, vector<1x8x8xf32>, vector<1x8x8xf32>, vector<1x8x8xf32> -> vector<4x8x8xf32>
    %30 = vector.extract_strided_slice %15 {offsets = [0, 0], sizes = [8, 8], strides = [1, 1]} : vector<8x32xf32> to vector<8x8xf32>
    %31 = vector.extract_strided_slice %15 {offsets = [0, 8], sizes = [8, 8], strides = [1, 1]} : vector<8x32xf32> to vector<8x8xf32>
    %32 = vector.extract_strided_slice %15 {offsets = [0, 16], sizes = [8, 8], strides = [1, 1]} : vector<8x32xf32> to vector<8x8xf32>
    %33 = vector.extract_strided_slice %15 {offsets = [0, 24], sizes = [8, 8], strides = [1, 1]} : vector<8x32xf32> to vector<8x8xf32>
    %34 = vector.shape_cast %30 : vector<8x8xf32> to vector<1x8x8xf32>
    %35 = vector.shape_cast %31 : vector<8x8xf32> to vector<1x8x8xf32>
    %36 = vector.shape_cast %32 : vector<8x8xf32> to vector<1x8x8xf32>
    %37 = vector.shape_cast %33 : vector<8x8xf32> to vector<1x8x8xf32>
    %38 = tpu.concatenate %34, %35, %36, %37 in 0 : vector<1x8x8xf32>, vector<1x8x8xf32>, vector<1x8x8xf32>, vector<1x8x8xf32> -> vector<4x8x8xf32>
    %39 = vector.extract_strided_slice %20 {offsets = [0, 0], sizes = [8, 8], strides = [1, 1]} : vector<8x32xf32> to vector<8x8xf32>
    %40 = vector.extract_strided_slice %20 {offsets = [0, 8], sizes = [8, 8], strides = [1, 1]} : vector<8x32xf32> to vector<8x8xf32>
    %41 = vector.extract_strided_slice %20 {offsets = [0, 16], sizes = [8, 8], strides = [1, 1]} : vector<8x32xf32> to vector<8x8xf32>
    %42 = vector.extract_strided_slice %20 {offsets = [0, 24], sizes = [8, 8], strides = [1, 1]} : vector<8x32xf32> to vector<8x8xf32>
    %43 = vector.shape_cast %39 : vector<8x8xf32> to vector<1x8x8xf32>
    %44 = vector.shape_cast %40 : vector<8x8xf32> to vector<1x8x8xf32>
    %45 = vector.shape_cast %41 : vector<8x8xf32> to vector<1x8x8xf32>
    %46 = vector.shape_cast %42 : vector<8x8xf32> to vector<1x8x8xf32>
    %47 = tpu.concatenate %43, %44, %45, %46 in 0 : vector<1x8x8xf32>, vector<1x8x8xf32>, vector<1x8x8xf32>, vector<1x8x8xf32> -> vector<4x8x8xf32>
    "tpu.trace_start"() <{level = 10 : i32, message = "hqd,hkd->hqk"}> : () -> ()
    %cst_22 = arith.constant dense<0.000000e+00> : vector<4x8x8xf32>
    %48 = tpu.matmul %29, %38, %cst_22 {dimension_numbers = #tpu.dot_dimension_numbers<[2], [2], [1], [1], [0, 0, 0, 1, 1, 1], [0], [0]>} : vector<4x8x8xf32>, vector<4x8x8xf32>, vector<4x8x8xf32> -> vector<4x8x8xf32>
    "tpu.trace_stop"() : () -> ()
    %cst_23 = arith.constant 0.176776692 : f32
    %49 = vector.broadcast %cst_23 : f32 to vector<4x8x8xf32>
    %50 = arith.mulf %48, %49 : vector<4x8x8xf32>
    %cst_24 = arith.constant dense<0xFF800000> : vector<4x8xf32>
    %51 = vector.multi_reduction <maximumf>, %50, %cst_24 [2] : vector<4x8x8xf32> to vector<4x8xf32>
    %52 = vector.shape_cast %51 : vector<4x8xf32> to vector<4x8x1xf32>
    %53 = vector.broadcast %52 : vector<4x8x1xf32> to vector<4x8x8xf32>
    %54 = arith.subf %50, %53 : vector<4x8x8xf32>
    %55 = math.exp %54 : vector<4x8x8xf32>
    %cst_25 = arith.constant dense<0.000000e+00> : vector<4x8xf32>
    %56 = vector.multi_reduction <add>, %55, %cst_25 [2] : vector<4x8x8xf32> to vector<4x8xf32>
    %57 = vector.shape_cast %56 : vector<4x8xf32> to vector<4x8x1xf32>
    %58 = tpu.reciprocal %57 {approx = true} : vector<4x8x1xf32> -> vector<4x8x1xf32>
    %59 = vector.broadcast %58 : vector<4x8x1xf32> to vector<4x8x8xf32>
    %60 = arith.mulf %55, %59 : vector<4x8x8xf32>
    "tpu.trace_start"() <{level = 10 : i32, message = "hqk,hkd->hqd"}> : () -> ()
    %cst_26 = arith.constant dense<0.000000e+00> : vector<4x8x8xf32>
    %61 = tpu.matmul %60, %47, %cst_26 {dimension_numbers = #tpu.dot_dimension_numbers<[2], [1], [1], [2], [0, 0, 0, 1, 1, 2], [0], [0]>} : vector<4x8x8xf32>, vector<4x8x8xf32>, vector<4x8x8xf32> -> vector<4x8x8xf32>
    "tpu.trace_stop"() : () -> ()
    %62 = vector.extract_strided_slice %61 {offsets = [0, 0, 0], sizes = [1, 8, 8], strides = [1, 1, 1]} : vector<4x8x8xf32> to vector<1x8x8xf32>
    %63 = vector.shape_cast %62 : vector<1x8x8xf32> to vector<8x8xf32>
    %64 = vector.extract_strided_slice %61 {offsets = [1, 0, 0], sizes = [1, 8, 8], strides = [1, 1, 1]} : vector<4x8x8xf32> to vector<1x8x8xf32>
    %65 = vector.shape_cast %64 : vector<1x8x8xf32> to vector<8x8xf32>
    %66 = vector.extract_strided_slice %61 {offsets = [2, 0, 0], sizes = [1, 8, 8], strides = [1, 1, 1]} : vector<4x8x8xf32> to vector<1x8x8xf32>
    %67 = vector.shape_cast %66 : vector<1x8x8xf32> to vector<8x8xf32>
    %68 = vector.extract_strided_slice %61 {offsets = [3, 0, 0], sizes = [1, 8, 8], strides = [1, 1, 1]} : vector<4x8x8xf32> to vector<1x8x8xf32>
    %69 = vector.shape_cast %68 : vector<1x8x8xf32> to vector<8x8xf32>
    %70 = tpu.concatenate %63, %65, %67, %69 in 1 : vector<8x8xf32>, vector<8x8xf32>, vector<8x8xf32>, vector<8x8xf32> -> vector<8x32xf32>
    %c0_27 = arith.constant 0 : index
    %c0_28 = arith.constant 0 : index
    %c0_29 = arith.constant 0 : index
    %71 = vector.load %arg10[%c0_27, %c0_28, %c0_29] : memref<1x8x32xf32, #tpu.memory_space<vmem>>, vector<1x8x32xf32>
    %72 = vector.shape_cast %71 : vector<1x8x32xf32> to vector<8x32xf32>
    %73 = vector.shape_cast %70 : vector<8x32xf32> to vector<1x8x32xf32>
    tpu.vector_store %arg10[%c0_27, %c0_28, %c0_29], %73 {strides = array<i32>} : memref<1x8x32xf32, #tpu.memory_space<vmem>>, vector<1x8x32xf32>,
    return
  }
  func.func @transform_0(%arg0: i32) -> (i32, i32, i32) {
    %c0_i32 = arith.constant 0 : i32
    %c0_i32_0 = arith.constant 0 : i32
    %c0_i32_1 = arith.constant 0 : i32
    return %arg0, %c0_i32, %c0_i32_0 : i32, i32, i32
  }
  func.func @transform_1(%arg0: i32) -> (i32, i32, i32) {
    %c0_i32 = arith.constant 0 : i32
    %c0_i32_0 = arith.constant 0 : i32
    %c0_i32_1 = arith.constant 0 : i32
    return %arg0, %c0_i32, %c0_i32_0 : i32, i32, i32
  }
  func.func @transform_2(%arg0: i32) -> (i32, i32, i32) {
    %c0_i32 = arith.constant 0 : i32
    %c0_i32_0 = arith.constant 0 : i32
    %c0_i32_1 = arith.constant 0 : i32
    return %arg0, %c0_i32, %c0_i32_0 : i32, i32, i32
  }
  func.func @transform_3(%arg0: i32) -> (i32, i32) {
    %c0_i32 = arith.constant 0 : i32
    %c0_i32_0 = arith.constant 0 : i32
    %c0_i32_1 = arith.constant 0 : i32
    return %c0_i32, %c0_i32_0 : i32, i32
  }
  func.func @transform_4(%arg0: i32) -> (i32, i32) {
    %c0_i32 = arith.constant 0 : i32
    %c0_i32_0 = arith.constant 0 : i32
    %c0_i32_1 = arith.constant 0 : i32
    return %c0_i32, %c0_i32_0 : i32, i32
  }
  func.func @transform_5(%arg0: i32) -> (i32, i32) {
    %c0_i32 = arith.constant 0 : i32
    %c0_i32_0 = arith.constant 0 : i32
    %c0_i32_1 = arith.constant 0 : i32
    return %c0_i32, %c0_i32_0 : i32, i32
  }
  func.func @transform_6(%arg0: i32) -> (i32, i32) {
    %c0_i32 = arith.constant 0 : i32
    %c0_i32_0 = arith.constant 0 : i32
    %c0_i32_1 = arith.constant 0 : i32
    return %c0_i32, %c0_i32_0 : i32, i32
  }
  func.func @transform_7(%arg0: i32) -> (i32, i32) {
    %c0_i32 = arith.constant 0 : i32
    %c0_i32_0 = arith.constant 0 : i32
    %c0_i32_1 = arith.constant 0 : i32
    return %c0_i32, %c0_i32_0 : i32, i32
  }
  func.func @transform_8(%arg0: i32) -> (i32, i32) {
    %c0_i32 = arith.constant 0 : i32
    %c0_i32_0 = arith.constant 0 : i32
    %c0_i32_1 = arith.constant 0 : i32
    return %c0_i32, %c0_i32_0 : i32, i32
  }
  func.func @transform_9(%arg0: i32) -> (i32, i32, i32) {
    %c0_i32 = arith.constant 0 : i32
    %c0_i32_0 = arith.constant 0 : i32
    %c0_i32_1 = arith.constant 0 : i32
    return %arg0, %c0_i32, %c0_i32_0 : i32, i32, i32
  }
}

</mosaic_0001>

<llo_original>
// kernel: tpu_custom_call.1
$region0: #{tpu_custom_call.1}
  #allocation0 [shape = 'u32[]', space=smem, size = 0x4, offset = 0x4, fixed_abs, tag = 'smem constant byte address 0x4 - core index']
  #allocation1 [shape = 'u32[72,128]{1,0:T(1,128)}', space=vmem, size = 0x9000, scoped, tag = 'internal scratch']
  %s0 = inlined_call_operand.hbm [shape: f32[2,8,32], index: 0, kind: input, shape index: {}]
  %s1 = inlined_call_operand.hbm [shape: f32[2,8,32], index: 1, kind: input, shape index: {}]
  %s2 = inlined_call_operand.hbm [shape: f32[2,8,32], index: 2, kind: input, shape index: {}]
  %s3 = inlined_call_operand.hbm [shape: f32[32,32], index: 3, kind: input, shape index: {}]
  %s4 = inlined_call_operand.vmem [shape: f32[1,32], index: 4, kind: input, shape index: {}]
  %s5 = inlined_call_operand.hbm [shape: f32[32,32], index: 5, kind: input, shape index: {}]
  %s6 = inlined_call_operand.vmem [shape: f32[1,32], index: 6, kind: input, shape index: {}]
  %s7 = inlined_call_operand.hbm [shape: f32[32,32], index: 7, kind: input, shape index: {}]
  %s8 = inlined_call_operand.vmem [shape: f32[1,32], index: 8, kind: input, shape index: {}]
  %s9 = inlined_call_operand.hbm [shape: f32[2,8,32], index: 9, kind: output, shape index: {}]
  %s10 = sld [smem:[#allocation0]]
  $region93: #{tpu_custom_call.1} parent=0
    _
  %s12 = ssub.s32 1, %s10
  %s13 = scalar_select 0, %s12, %s10
  $region1: #{tpu_custom_call.1} parent=0
    #allocation2 [shape = 'u8[8192]{0}', space=vmem, size = 0x2000, scoped, tag = 'input window, operand 0']
    #allocation3 [shape = 's32[2]{0}', space=sflag, size = 0x8, scoped, tag = 'scoped memory for tpu_custom_call.1']
    #allocation4 [shape = 's32[2]{0}', space=sflag, size = 0x8, scoped, tag = 'scoped memory for tpu_custom_call.1']
    #allocation5 [shape = 'u8[8192]{0}', space=vmem, size = 0x2000, scoped, tag = 'input window, operand 1']
    #allocation6 [shape = 's32[2]{0}', space=sflag, size = 0x8, scoped, tag = 'scoped memory for tpu_custom_call.1']
    #allocation7 [shape = 'u8[8192]{0}', space=vmem, size = 0x2000, scoped, tag = 'input window, operand 2']
    #allocation8 [shape = 'u8[16384]{0}', space=vmem, size = 0x4000, scoped, tag = 'input window, operand 3, single buffered']
    #allocation9 [shape = 's32[1]{0}', space=sflag, size = 0x4, scoped, tag = 'scoped memory for tpu_custom_call.1']
    #allocation10 [shape = 'u8[16384]{0}', space=vmem, size = 0x4000, scoped, tag = 'input window, operand 5, single buffered']
    #allocation11 [shape = 'u8[16384]{0}', space=vmem, size = 0x4000, scoped, tag = 'input window, operand 7, single buffered']
    #allocation12 [shape = 's32[1]{0}', space=sflag, size = 0x4, scoped, tag = 'scoped memory for tpu_custom_call.1']
    #allocation13 [shape = 'u8[8192]{0}', space=vmem, size = 0x2000, scoped, tag = 'output window, operand 0']
    %14 = vsyncpa [#allocation3], 0
    %s15 = scalar_lea.sflag [#allocation3], 1
    %16 = vsyncpa %s15, 0
    %17 = vsyncpa [#allocation6], 0
    %s18 = scalar_lea.sflag [#allocation6], 1
    %19 = vsyncpa %s18, 0
    %20 = vsyncpa [#allocation9], 0
    %21 = vsyncpa [#allocation12], 0
    %22 = vsyncpa [#allocation4], 0
    %s23 = scalar_lea.sflag [#allocation4], 1
    %24 = vsyncpa %s23, 0
    loop: start=0, step=1, limit=4
    $region2: #{tpu_custom_call.1} parent=1 // loop_pre_header
      _
    $region3: #{tpu_custom_call.1} parent=1 // loop_header
      %s26 = sphi 0, %s30
      %p27 = scmp.ge.s32.totalorder %s26, 4
      %s36 = sphi 0, %s38
      %s39 = sphi 0, %s36
      %s40 = sphi 0, %s39
      %s56 = sphi 0, %s40
      %s62 = sphi 0, %s64
      %s65 = sphi 0, %s62
      %s66 = sphi 0, %s65
      %s82 = sphi 0, %s66
      %s88 = sphi 0, %s90
      %s91 = sphi 0, %s88
      %s92 = sphi 0, %s91
      %s108 = sphi 0, %s92
      %s112 = sphi 0, %s112
      %s114 = sphi 0, %s112
      %s115 = sphi 0, %s114
      %s129 = sphi 0, %s115
      %s133 = sphi 0, %s133
      %s135 = sphi 0, %s133
      %s136 = sphi 0, %s135
      %s150 = sphi 0, %s136
      %s154 = sphi 0, %s154
      %s156 = sphi 0, %s154
      %s157 = sphi 0, %s156
      %s171 = sphi 0, %s157
      %s175 = sphi 0, %s175
      %s177 = sphi 0, %s175
      %s178 = sphi 0, %s177
      %s192 = sphi 0, %s178
      %s196 = sphi 0, %s196
      %s198 = sphi 0, %s196
      %s199 = sphi 0, %s198
      %s213 = sphi 0, %s199
      %s217 = sphi 0, %s217
      %s219 = sphi 0, %s217
      %s220 = sphi 0, %s219
      %s234 = sphi 0, %s220
      %s240 = sphi 0, %s242
      %s243 = sphi 0, %s240
      %s244 = sphi 0, %s243
      %s260 = sphi 0, %s244
    $region4: #{tpu_custom_call.1} parent=1 // loop_header_branch
      %29 = sbr.rel (%p27) target = $region8
    $region5: #{tpu_custom_call.1} parent=1 // loop_body
      %s31 = ssub.s32 %s26, 1
      %s32 = ssub.s32 %s26, 2
      %s33 = sadd.s32 %s26, 1
      %s34 = ssub.s32 %s26, %s33
      %p35 = scmp.eq.s32.totalorder %s34, 0
      %s37 = sadd.s32 %s36, 1
      %s38 = scalar_select %p35, %s36, %s37
      %p41 = pneg %p35
      %p42 = scmp.eq.s32.totalorder %s26, 1
      %p43 = por %p41, %p42
      %p44 = scmp.ne.s32.totalorder %s36, %s39
      %p45 = scmp.eq.s32.totalorder %s26, 0
      %p46 = por %p44, %p45
      %p47 = scmp.ne.s32.totalorder %s36, %s39
      %p48 = scmp.eq.s32.totalorder %s31, 1
      %p49 = por %p47, %p48
      %p50 = scmp.ne.s32.totalorder %s39, %s40
      %p51 = scmp.eq.s32.totalorder %s31, 0
      %p52 = por %p50, %p51
      %p53 = scmp.ne.s32.totalorder %s39, %s40
      %p54 = scmp.eq.s32.totalorder %s32, 1
      %p55 = por %p53, %p54
      %p57 = scmp.ne.s32.totalorder %s40, %s56
      %p58 = scmp.eq.s32.totalorder %s32, 0
      %p59 = por %p57, %p58
      %s60 = ssub.s32 %s26, %s33
      %p61 = scmp.eq.s32.totalorder %s60, 0
      %s63 = sadd.s32 %s62, 1
      %s64 = scalar_select %p61, %s62, %s63
      %p67 = pneg %p61
      %p68 = scmp.eq.s32.totalorder %s26, 1
      %p69 = por %p67, %p68
      %p70 = scmp.ne.s32.totalorder %s62, %s65
      %p71 = scmp.eq.s32.totalorder %s26, 0
      %p72 = por %p70, %p71
      %p73 = scmp.ne.s32.totalorder %s62, %s65
      %p74 = scmp.eq.s32.totalorder %s31, 1
      %p75 = por %p73, %p74
      %p76 = scmp.ne.s32.totalorder %s65, %s66
      %p77 = scmp.eq.s32.totalorder %s31, 0
      %p78 = por %p76, %p77
      %p79 = scmp.ne.s32.totalorder %s65, %s66
      %p80 = scmp.eq.s32.totalorder %s32, 1
      %p81 = por %p79, %p80
      %p83 = scmp.ne.s32.totalorder %s66, %s82
      %p84 = scmp.eq.s32.totalorder %s32, 0
      %p85 = por %p83, %p84
      %s86 = ssub.s32 %s26, %s33
      %p87 = scmp.eq.s32.totalorder %s86, 0
      %s89 = sadd.s32 %s88, 1
      %s90 = scalar_select %p87, %s88, %s89
      %p93 = pneg %p87
      %p94 = scmp.eq.s32.totalorder %s26, 1
      %p95 = por %p93, %p94
      %p96 = scmp.ne.s32.totalorder %s88, %s91
      %p97 = scmp.eq.s32.totalorder %s26, 0
      %p98 = por %p96, %p97
      %p99 = scmp.ne.s32.totalorder %s88, %s91
      %p100 = scmp.eq.s32.totalorder %s31, 1
      %p101 = por %p99, %p100
      %p102 = scmp.ne.s32.totalorder %s91, %s92
      %p103 = scmp.eq.s32.totalorder %s31, 0
      %p104 = por %p102, %p103
      %p105 = scmp.ne.s32.totalorder %s91, %s92
      %p106 = scmp.eq.s32.totalorder %s32, 1
      %p107 = por %p105, %p106
      %p109 = scmp.ne.s32.totalorder %s92, %s108
      %p110 = scmp.eq.s32.totalorder %s32, 0
      %p111 = por %p109, %p110
      %s113 = sadd.s32 %s112, 1
      %p116 = scmp.eq.s32.totalorder %s26, 1
      %p117 = scmp.ne.s32.totalorder %s112, %s114
      %p118 = scmp.eq.s32.totalorder %s26, 0
      %p119 = por %p117, %p118
      %p120 = scmp.ne.s32.totalorder %s112, %s114
      %p121 = scmp.eq.s32.totalorder %s31, 1
      %p122 = por %p120, %p121
      %p123 = scmp.ne.s32.totalorder %s114, %s115
      %p124 = scmp.eq.s32.totalorder %s31, 0
      %p125 = por %p123, %p124
      %p126 = scmp.ne.s32.totalorder %s114, %s115
      %p127 = scmp.eq.s32.totalorder %s32, 1
      %p128 = por %p126, %p127
      %p130 = scmp.ne.s32.totalorder %s115, %s129
      %p131 = scmp.eq.s32.totalorder %s32, 0
      %p132 = por %p130, %p131
      %s134 = sadd.s32 %s133, 1
      %p137 = scmp.eq.s32.totalorder %s26, 1
      %p138 = scmp.ne.s32.totalorder %s133, %s135
      %p139 = scmp.eq.s32.totalorder %s26, 0
      %p140 = por %p138, %p139
      %p141 = scmp.ne.s32.totalorder %s133, %s135
      %p142 = scmp.eq.s32.totalorder %s31, 1
      %p143 = por %p141, %p142
      %p144 = scmp.ne.s32.totalorder %s135, %s136
      %p145 = scmp.eq.s32.totalorder %s31, 0
      %p146 = por %p144, %p145
      %p147 = scmp.ne.s32.totalorder %s135, %s136
      %p148 = scmp.eq.s32.totalorder %s32, 1
      %p149 = por %p147, %p148
      %p151 = scmp.ne.s32.totalorder %s136, %s150
      %p152 = scmp.eq.s32.totalorder %s32, 0
      %p153 = por %p151, %p152
      %s155 = sadd.s32 %s154, 1
      %p158 = scmp.eq.s32.totalorder %s26, 1
      %p159 = scmp.ne.s32.totalorder %s154, %s156
      %p160 = scmp.eq.s32.totalorder %s26, 0
      %p161 = por %p159, %p160
      %p162 = scmp.ne.s32.totalorder %s154, %s156
      %p163 = scmp.eq.s32.totalorder %s31, 1
      %p164 = por %p162, %p163
      %p165 = scmp.ne.s32.totalorder %s156, %s157
      %p166 = scmp.eq.s32.totalorder %s31, 0
      %p167 = por %p165, %p166
      %p168 = scmp.ne.s32.totalorder %s156, %s157
      %p169 = scmp.eq.s32.totalorder %s32, 1
      %p170 = por %p168, %p169
      %p172 = scmp.ne.s32.totalorder %s157, %s171
      %p173 = scmp.eq.s32.totalorder %s32, 0
      %p174 = por %p172, %p173
      %s176 = sadd.s32 %s175, 1
      %p179 = scmp.eq.s32.totalorder %s26, 1
      %p180 = scmp.ne.s32.totalorder %s175, %s177
      %p181 = scmp.eq.s32.totalorder %s26, 0
      %p182 = por %p180, %p181
      %p183 = scmp.ne.s32.totalorder %s175, %s177
      %p184 = scmp.eq.s32.totalorder %s31, 1
      %p185 = por %p183, %p184
      %p186 = scmp.ne.s32.totalorder %s177, %s178
      %p187 = scmp.eq.s32.totalorder %s31, 0
      %p188 = por %p186, %p187
      %p189 = scmp.ne.s32.totalorder %s177, %s178
      %p190 = scmp.eq.s32.totalorder %s32, 1
      %p191 = por %p189, %p190
      %p193 = scmp.ne.s32.totalorder %s178, %s192
      %p194 = scmp.eq.s32.totalorder %s32, 0
      %p195 = por %p193, %p194
      %s197 = sadd.s32 %s196, 1
      %p200 = scmp.eq.s32.totalorder %s26, 1
      %p201 = scmp.ne.s32.totalorder %s196, %s198
      %p202 = scmp.eq.s32.totalorder %s26, 0
      %p203 = por %p201, %p202
      %p204 = scmp.ne.s32.totalorder %s196, %s198
      %p205 = scmp.eq.s32.totalorder %s31, 1
      %p206 = por %p204, %p205
      %p207 = scmp.ne.s32.totalorder %s198, %s199
      %p208 = scmp.eq.s32.totalorder %s31, 0
      %p209 = por %p207, %p208
      %p210 = scmp.ne.s32.totalorder %s198, %s199
      %p211 = scmp.eq.s32.totalorder %s32, 1
      %p212 = por %p210, %p211
      %p214 = scmp.ne.s32.totalorder %s199, %s213
      %p215 = scmp.eq.s32.totalorder %s32, 0
      %p216 = por %p214, %p215
      %s218 = sadd.s32 %s217, 1
      %p221 = scmp.eq.s32.totalorder %s26, 1
      %p222 = scmp.ne.s32.totalorder %s217, %s219
      %p223 = scmp.eq.s32.totalorder %s26, 0
      %p224 = por %p222, %p223
      %p225 = scmp.ne.s32.totalorder %s217, %s219
      %p226 = scmp.eq.s32.totalorder %s31, 1
      %p227 = por %p225, %p226
      %p228 = scmp.ne.s32.totalorder %s219, %s220
      %p229 = scmp.eq.s32.totalorder %s31, 0
      %p230 = por %p228, %p229
      %p231 = scmp.ne.s32.totalorder %s219, %s220
      %p232 = scmp.eq.s32.totalorder %s32, 1
      %p233 = por %p231, %p232
      %p235 = scmp.ne.s32.totalorder %s220, %s234
      %p236 = scmp.eq.s32.totalorder %s32, 0
      %p237 = por %p235, %p236
      %s238 = ssub.s32 %s26, %s33
      %p239 = scmp.eq.s32.totalorder %s238, 0
      %s241 = sadd.s32 %s240, 1
      %s242 = scalar_select %p239, %s240, %s241
      %p245 = pneg %p239
      %p246 = scmp.eq.s32.totalorder %s26, 1
      %p247 = por %p245, %p246
      %p248 = scmp.ne.s32.totalorder %s240, %s243
      %p249 = scmp.eq.s32.totalorder %s26, 0
      %p250 = por %p248, %p249
      %p251 = scmp.ne.s32.totalorder %s240, %s243
      %p252 = scmp.eq.s32.totalorder %s31, 1
      %p253 = por %p251, %p252
      %p254 = scmp.ne.s32.totalorder %s243, %s244
      %p255 = scmp.eq.s32.totalorder %s31, 0
      %p256 = por %p254, %p255
      %p257 = scmp.ne.s32.totalorder %s243, %s244
      %p258 = scmp.eq.s32.totalorder %s32, 1
      %p259 = por %p257, %p258
      %p261 = scmp.ne.s32.totalorder %s244, %s260
      %p262 = scmp.eq.s32.totalorder %s32, 0
      %p263 = por %p261, %p262
      %p264 = scmp.le.s32.totalorder 1, %s26
      %p265 = scmp.lt.s32.totalorder %s26, 3
      %p266 = pnand %p264, %p265
      %p267 = pneg %p266
      // Predicated region
      $region9: #{tpu_custom_call.1} parent=5 // pred_check
        _
      $region10: #{tpu_custom_call.1} parent=5 // pred_check_branch
        %269 = sbr.rel (%p266) target = $region12
      $region11: #{tpu_custom_call.1} parent=5 // pred_region
        %s270 = ssub.s32 %s26, 1
        // Predicated region
        $region13: #{tpu_custom_call.1} parent=11 // pred_check
          %p271 = pneg %p125
        $region14: #{tpu_custom_call.1} parent=11 // pred_check_branch
          %273 = sbr.rel (%p271) target = $region16
        $region15: #{tpu_custom_call.1} parent=11 // pred_region
          %275 = vsyncadd [#allocation9], 0
          %s276 = sshll.u32 %s3, 4
          %s277 = int_to_ptr.hbm [resolvable:$true] %s276
          %s278 = sshll.u32 [#allocation8], 4
          %s279 = int_to_ptr.vmem [resolvable:$true] %s278
          %284 = dma.hbm_to_vmem [thread:$0]  %s277, 512, %s279, [#allocation9], 128, 128, 8
        $region16: #{tpu_custom_call.1} parent=11 // pred_fallthru
          _
        // Predicated region
        $region17: #{tpu_custom_call.1} parent=11 // pred_check
          %p285 = pneg %p146
        $region18: #{tpu_custom_call.1} parent=11 // pred_check_branch
          %287 = sbr.rel (%p285) target = $region20
        $region19: #{tpu_custom_call.1} parent=11 // pred_region
          _
        $region20: #{tpu_custom_call.1} parent=11 // pred_fallthru
          _
        // Predicated region
        $region21: #{tpu_custom_call.1} parent=11 // pred_check
          %p288 = pneg %p167
        $region22: #{tpu_custom_call.1} parent=11 // pred_check_branch
          %290 = sbr.rel (%p288) target = $region24
        $region23: #{tpu_custom_call.1} parent=11 // pred_region
          %292 = vsyncadd [#allocation9], 0
          %s293 = sshll.u32 %s5, 4
          %s294 = int_to_ptr.hbm [resolvable:$true] %s293
          %s295 = sshll.u32 [#allocation10], 4
          %s296 = int_to_ptr.vmem [resolvable:$true] %s295
          %301 = dma.hbm_to_vmem [thread:$0]  %s294, 512, %s296, [#allocation9], 128, 128, 8
        $region24: #{tpu_custom_call.1} parent=11 // pred_fallthru
          _
        // Predicated region
        $region25: #{tpu_custom_call.1} parent=11 // pred_check
          %p302 = pneg %p188
        $region26: #{tpu_custom_call.1} parent=11 // pred_check_branch
          %304 = sbr.rel (%p302) target = $region28
        $region27: #{tpu_custom_call.1} parent=11 // pred_region
          _
        $region28: #{tpu_custom_call.1} parent=11 // pred_fallthru
          _
        // Predicated region
        $region29: #{tpu_custom_call.1} parent=11 // pred_check
          %p305 = pneg %p209
        $region30: #{tpu_custom_call.1} parent=11 // pred_check_branch
          %307 = sbr.rel (%p305) target = $region32
        $region31: #{tpu_custom_call.1} parent=11 // pred_region
          %309 = vsyncadd [#allocation12], 0
          %s310 = sshll.u32 %s7, 4
          %s311 = int_to_ptr.hbm [resolvable:$true] %s310
          %s312 = sshll.u32 [#allocation11], 4
          %s313 = int_to_ptr.vmem [resolvable:$true] %s312
          %318 = dma.hbm_to_vmem [thread:$0]  %s311, 512, %s313, [#allocation12], 128, 128, 8
        $region32: #{tpu_custom_call.1} parent=11 // pred_fallthru
          _
        // Predicated region
        $region33: #{tpu_custom_call.1} parent=11 // pred_check
          %p319 = pneg %p230
        $region34: #{tpu_custom_call.1} parent=11 // pred_check_branch
          %321 = sbr.rel (%p319) target = $region36
        $region35: #{tpu_custom_call.1} parent=11 // pred_region
          _
        $region36: #{tpu_custom_call.1} parent=11 // pred_fallthru
          _
      $region12: #{tpu_custom_call.1} parent=5 // pred_fallthru
        _
      %p322 = scmp.lt.s32.totalorder %s26, 2
      // Predicated region
      $region37: #{tpu_custom_call.1} parent=5 // pred_check
        %p323 = pneg %p322
      $region38: #{tpu_custom_call.1} parent=5 // pred_check_branch
        %325 = sbr.rel (%p323) target = $region40
      $region39: #{tpu_custom_call.1} parent=5 // pred_region
        // Predicated region
        $region41: #{tpu_custom_call.1} parent=39 // pred_check
          %p326 = pneg %p46
        $region42: #{tpu_custom_call.1} parent=39 // pred_check_branch
          %328 = sbr.rel (%p326) target = $region44
        $region43: #{tpu_custom_call.1} parent=39 // pred_region
          %s329 = sand.u32 %s36, 1
          %s330 = scalar_lea.sflag [#allocation3], %s329
          %s331 = sand.u32 %s36, 1
          %s332 = smul.addr %s331, 8
          %s333 = scalar_lea.vmem [#allocation2], %s332
          %335 = vsyncadd %s330, 0
          %s336 = smul.addr %s26, 8
          %s337 = scalar_lea.hbm %s0, %s336
          %s339 = sshll.u32 %s337, 4
          %s340 = int_to_ptr.hbm [resolvable:$true] %s339
          %s341 = sshll.u32 %s333, 4
          %s342 = int_to_ptr.vmem [resolvable:$true] %s341
          %344 = dma.hbm_to_vmem [thread:$0]  %s340, 128, %s342, %s330
        $region44: #{tpu_custom_call.1} parent=39 // pred_fallthru
          _
        // Predicated region
        $region45: #{tpu_custom_call.1} parent=39 // pred_check
          %p345 = pneg %p72
        $region46: #{tpu_custom_call.1} parent=39 // pred_check_branch
          %347 = sbr.rel (%p345) target = $region48
        $region47: #{tpu_custom_call.1} parent=39 // pred_region
          %s348 = sand.u32 %s26, 1
          %s349 = scalar_lea.sflag [#allocation6], %s348
          %s350 = sand.u32 %s62, 1
          %s351 = smul.addr %s350, 8
          %s352 = scalar_lea.vmem [#allocation5], %s351
          %354 = vsyncadd %s349, 0
          %s355 = smul.addr %s26, 8
          %s356 = scalar_lea.hbm %s1, %s355
          %s358 = sshll.u32 %s356, 4
          %s359 = int_to_ptr.hbm [resolvable:$true] %s358
          %s360 = sshll.u32 %s352, 4
          %s361 = int_to_ptr.vmem [resolvable:$true] %s360
          %363 = dma.hbm_to_vmem [thread:$0]  %s359, 128, %s361, %s349
        $region48: #{tpu_custom_call.1} parent=39 // pred_fallthru
          _
        // Predicated region
        $region49: #{tpu_custom_call.1} parent=39 // pred_check
          %p364 = pneg %p98
        $region50: #{tpu_custom_call.1} parent=39 // pred_check_branch
          %366 = sbr.rel (%p364) target = $region52
        $region51: #{tpu_custom_call.1} parent=39 // pred_region
          %s367 = sand.u32 %s26, 1
          %s368 = scalar_lea.sflag [#allocation6], %s367
          %s369 = sand.u32 %s88, 1
          %s370 = smul.addr %s369, 8
          %s371 = scalar_lea.vmem [#allocation7], %s370
          %373 = vsyncadd %s368, 0
          %s374 = smul.addr %s26, 8
          %s375 = scalar_lea.hbm %s2, %s374
          %s377 = sshll.u32 %s375, 4
          %s378 = int_to_ptr.hbm [resolvable:$true] %s377
          %s379 = sshll.u32 %s371, 4
          %s380 = int_to_ptr.vmem [resolvable:$true] %s379
          %382 = dma.hbm_to_vmem [thread:$0]  %s378, 128, %s380, %s368
        $region52: #{tpu_custom_call.1} parent=39 // pred_fallthru
          _
      $region40: #{tpu_custom_call.1} parent=5 // pred_fallthru
        _
      %p383 = scmp.le.s32.totalorder 1, %s26
      %p384 = scmp.lt.s32.totalorder %s26, 3
      %p385 = pnand %p383, %p384
      %p386 = pneg %p385
      // Predicated region
      $region53: #{tpu_custom_call.1} parent=5 // pred_check
        _
      $region54: #{tpu_custom_call.1} parent=5 // pred_check_branch
        %388 = sbr.rel (%p385) target = $region56
      $region55: #{tpu_custom_call.1} parent=5 // pred_region
        %s389 = ssub.s32 %s26, 1
        %s390 = sand.u32 %s39, 1
        %s391 = scalar_lea.sflag [#allocation3], %s390
        %s392 = sand.u32 %s39, 1
        %s393 = smul.addr %s392, 8
        %s394 = scalar_lea.vmem [#allocation2], %s393
        // Predicated region
        $region57: #{tpu_custom_call.1} parent=55 // pred_check
          %p395 = pneg %p52
        $region58: #{tpu_custom_call.1} parent=55 // pred_check_branch
          %397 = sbr.rel (%p395) target = $region60
        $region59: #{tpu_custom_call.1} parent=55 // pred_region
          %399 = dma.done %s391, 128
        $region60: #{tpu_custom_call.1} parent=55 // pred_fallthru
          _
        %s400 = sand.u32 %s31, 1
        %s401 = scalar_lea.sflag [#allocation6], %s400
        %s402 = sand.u32 %s65, 1
        %s403 = smul.addr %s402, 8
        %s404 = scalar_lea.vmem [#allocation5], %s403
        // Predicated region
        $region61: #{tpu_custom_call.1} parent=55 // pred_check
          %p405 = pneg %p78
        $region62: #{tpu_custom_call.1} parent=55 // pred_check_branch
          %407 = sbr.rel (%p405) target = $region64
        $region63: #{tpu_custom_call.1} parent=55 // pred_region
          %409 = dma.done %s401, 128
        $region64: #{tpu_custom_call.1} parent=55 // pred_fallthru
          _
        %s410 = sand.u32 %s31, 1
        %s411 = scalar_lea.sflag [#allocation6], %s410
        %s412 = sand.u32 %s91, 1
        %s413 = smul.addr %s412, 8
        %s414 = scalar_lea.vmem [#allocation7], %s413
        // Predicated region
        $region65: #{tpu_custom_call.1} parent=55 // pred_check
          %p415 = pneg %p104
        $region66: #{tpu_custom_call.1} parent=55 // pred_check_branch
          %417 = sbr.rel (%p415) target = $region68
        $region67: #{tpu_custom_call.1} parent=55 // pred_region
          %419 = dma.done %s411, 128
        $region68: #{tpu_custom_call.1} parent=55 // pred_fallthru
          _
        // Predicated region
        $region69: #{tpu_custom_call.1} parent=55 // pred_check
          %p420 = pneg %p125
        $region70: #{tpu_custom_call.1} parent=55 // pred_check_branch
          %422 = sbr.rel (%p420) target = $region72
        $region71: #{tpu_custom_call.1} parent=55 // pred_region
          %424 = dma.done [#allocation9], 512
        $region72: #{tpu_custom_call.1} parent=55 // pred_fallthru
          _
        // Predicated region
        $region73: #{tpu_custom_call.1} parent=55 // pred_check
          %p425 = pneg %p167
        $region74: #{tpu_custom_call.1} parent=55 // pred_check_branch
          %427 = sbr.rel (%p425) target = $region76
        $region75: #{tpu_custom_call.1} parent=55 // pred_region
          %429 = dma.done [#allocation9], 512
        $region76: #{tpu_custom_call.1} parent=55 // pred_fallthru
          _
        // Predicated region
        $region77: #{tpu_custom_call.1} parent=55 // pred_check
          %p430 = pneg %p209
        $region78: #{tpu_custom_call.1} parent=55 // pred_check_branch
          %432 = sbr.rel (%p430) target = $region80
        $region79: #{tpu_custom_call.1} parent=55 // pred_region
          %434 = dma.done [#allocation12], 512
        $region80: #{tpu_custom_call.1} parent=55 // pred_fallthru
          _
        %s435 = sand.u32 %s39, 1
        %s436 = scalar_lea.sflag [#allocation3], %s435
        %s437 = sand.u32 %s39, 1
        %s438 = smul.addr %s437, 8
        %s439 = scalar_lea.vmem [#allocation2], %s438
        %p440 = pneg %p52
        %p441 = pneg %p49
        %s442 = sand.u32 %s31, 1
        %s443 = scalar_lea.sflag [#allocation6], %s442
        %s444 = sand.u32 %s65, 1
        %s445 = smul.addr %s444, 8
        %s446 = scalar_lea.vmem [#allocation5], %s445
        %p447 = pneg %p78
        %p448 = pneg %p75
        %s449 = sand.u32 %s31, 1
        %s450 = scalar_lea.sflag [#allocation6], %s449
        %s451 = sand.u32 %s91, 1
        %s452 = smul.addr %s451, 8
        %s453 = scalar_lea.vmem [#allocation7], %s452
        %p454 = pneg %p104
        %p455 = pneg %p101
        %p456 = pneg %p125
        %p457 = pneg %p122
        %p458 = pneg %p146
        %p459 = pneg %p143
        %p460 = pneg %p167
        %p461 = pneg %p164
        %p462 = pneg %p188
        %p463 = pneg %p185
        %p464 = pneg %p209
        %p465 = pneg %p206
        %p466 = pneg %p230
        %p467 = pneg %p227
        %p468 = pneg %p256
        %p469 = pneg %p253
        %s470 = sand.u32 %s243, 1
        %s471 = scalar_lea.sflag [#allocation4], %s470
        %s472 = sand.u32 %s243, 1
        %s473 = smul.addr %s472, 8
        %s474 = scalar_lea.vmem [#allocation13], %s473
        %v475 = vld [vmem:[%s394] sm:$0xff]
        %v476 = vld [vmem:[%s404] sm:$0xff]
        %v477 = vld [vmem:[%s414] sm:$0xff]
        %v478 = vld [vmem:[#allocation8] sm:$0xff]
        %v479 = vld [vmem:[#allocation8 + $0x8] sm:$0xff]
        %v480 = vld [vmem:[#allocation8 + $0x10] sm:$0xff]
        %v481 = vld [vmem:[#allocation8 + $0x18] sm:$0xff]
        %v482 = vld [vmem:[%s4] sm:$0x1]
        %v484 = vperm.slane %v482, 0
        %vm486 = vcmask 261120
        %v488 = vsel %vm486, %v475, 0
        %490 = vmatpush.msra.mxu0 0.0
        %491 = vmatpush.msra.mxu0 0.0
        %492 = vmatpush.msra.mxu0 0.0
        %493 = vmatpush.msra.mxu0 0.0
        %494 = vmatpush.msra.mxu0 0.0
        %495 = vmatpush.msra.mxu0 0.0
        %496 = vmatpush.msra.mxu0 0.0
        %497 = vmatpush.msra.mxu0 0.0
        %498 = vmatpush.msra.mxu0 0.0
        %499 = vmatpush.msra.mxu0 0.0
        %500 = vmatpush.msra.mxu0 0.0
        %501 = vmatpush.msra.mxu0 0.0
        %502 = vmatpush.msra.mxu0 %v481
        %503 = vmatpush.msra.mxu0 %v480
        %504 = vmatpush.msra.mxu0 %v479
        %505 = vmatpush.msra.mxu0 %v478
        %506 = vmatmul.f32.gmra.mxu0 %v488
        %v507 = vpop.f32.mrf.mxu0
        %v508 = vadd.f32 %v484, %v507
        %509 = vdwg.mxu0
        %v510 = vld [vmem:[#allocation10] sm:$0xff]
        %v511 = vld [vmem:[#allocation10 + $0x8] sm:$0xff]
        %v512 = vld [vmem:[#allocation10 + $0x10] sm:$0xff]
        %v513 = vld [vmem:[#allocation10 + $0x18] sm:$0xff]
        %v514 = vld [vmem:[%s6] sm:$0x1]
        %v516 = vperm.slane %v514, 0
        %v519 = vsel %vm486, %v476, 0
        %521 = vmatpush.msra.mxu0 0.0
        %522 = vmatpush.msra.mxu0 0.0
        %523 = vmatpush.msra.mxu0 0.0
        %524 = vmatpush.msra.mxu0 0.0
        %525 = vmatpush.msra.mxu0 0.0
        %526 = vmatpush.msra.mxu0 0.0
        %527 = vmatpush.msra.mxu0 0.0
        %528 = vmatpush.msra.mxu0 0.0
        %529 = vmatpush.msra.mxu0 0.0
        %530 = vmatpush.msra.mxu0 0.0
        %531 = vmatpush.msra.mxu0 0.0
        %532 = vmatpush.msra.mxu0 0.0
        %533 = vmatpush.msra.mxu0 %v513
        %534 = vmatpush.msra.mxu0 %v512
        %535 = vmatpush.msra.mxu0 %v511
        %536 = vmatpush.msra.mxu0 %v510
        %537 = vmatmul.f32.gmra.mxu0 %v519
        %v538 = vpop.f32.mrf.mxu0
        %v539 = vadd.f32 %v516, %v538
        %540 = vdwg.mxu0
        %v541 = vld [vmem:[#allocation11] sm:$0xff]
        %v542 = vld [vmem:[#allocation11 + $0x8] sm:$0xff]
        %v543 = vld [vmem:[#allocation11 + $0x10] sm:$0xff]
        %v544 = vld [vmem:[#allocation11 + $0x18] sm:$0xff]
        %v545 = vld [vmem:[%s8] sm:$0x1]
        %v547 = vperm.slane %v545, 0
        %v550 = vsel %vm486, %v477, 0
        %552 = vmatpush.msra.mxu0 0.0
        %553 = vmatpush.msra.mxu0 0.0
        %554 = vmatpush.msra.mxu0 0.0
        %555 = vmatpush.msra.mxu0 0.0
        %556 = vmatpush.msra.mxu0 0.0
        %557 = vmatpush.msra.mxu0 0.0
        %558 = vmatpush.msra.mxu0 0.0
        %559 = vmatpush.msra.mxu0 0.0
        %560 = vmatpush.msra.mxu0 0.0
        %561 = vmatpush.msra.mxu0 0.0
        %562 = vmatpush.msra.mxu0 0.0
        %563 = vmatpush.msra.mxu0 0.0
        %564 = vmatpush.msra.mxu0 %v544
        %565 = vmatpush.msra.mxu0 %v543
        %566 = vmatpush.msra.mxu0 %v542
        %567 = vmatpush.msra.mxu0 %v541
        %568 = vmatmul.f32.gmra.mxu0 %v550
        %v569 = vpop.f32.mrf.mxu0
        %v570 = vadd.f32 %v547, %v569
        %571 = vdwg.mxu0
        %573 = vrot.lane.b32.xlu0 %v508, 120
        %v574 = vpop.permute.xlu0 %573
        %575 = vrot.lane.b32.xlu0 %v508, 112
        %v576 = vpop.permute.xlu0 %575
        %577 = vrot.lane.b32.xlu0 %v508, 104
        %v578 = vpop.permute.xlu0 %577
        %580 = vrot.lane.b32.xlu0 %v539, 120
        %v581 = vpop.permute.xlu0 %580
        %582 = vrot.lane.b32.xlu0 %v539, 112
        %v583 = vpop.permute.xlu0 %582
        %584 = vrot.lane.b32.xlu0 %v539, 104
        %v585 = vpop.permute.xlu0 %584
        %587 = vrot.lane.b32.xlu0 %v570, 120
        %v588 = vpop.permute.xlu0 %587
        %590 = vrot.lane.b32.xlu0 %v570, 112
        %v591 = vpop.permute.xlu0 %590
        %593 = vrot.lane.b32.xlu0 %v570, 104
        %v594 = vpop.permute.xlu0 %593
        %vm596 = vcmask 64512
        %v597 = vsel %vm596, %v508, 0
        %v599 = vsel %vm596, %v539, 0
        %601 = vmatpush.xpose.msra.mxu0 0.0
        %602 = vmatpush.xpose.msra.mxu0 0.0
        %603 = vmatpush.xpose.msra.mxu0 0.0
        %604 = vmatpush.xpose.msra.mxu0 0.0
        %605 = vmatpush.xpose.msra.mxu0 0.0
        %606 = vmatpush.xpose.msra.mxu0 0.0
        %607 = vmatpush.xpose.msra.mxu0 0.0
        %608 = vmatpush.xpose.msra.mxu0 0.0
        %609 = vmatpush.xpose.msra.mxu0 0.0
        %610 = vmatpush.xpose.msra.mxu0 0.0
        %611 = vmatpush.xpose.msra.mxu0 0.0
        %612 = vmatpush.xpose.msra.mxu0 0.0
        %613 = vmatpush.xpose.msra.mxu0 0.0
        %614 = vmatpush.xpose.msra.mxu0 0.0
        %615 = vmatpush.xpose.msra.mxu0 0.0
        %616 = vmatpush.xpose.msra.mxu0 %v599
        %617 = vmatmul.f32.gmra.mxu0 %v597
        %v618 = vpop.f32.mrf.mxu0
        %v619 = vadd.f32 0.0, %v618
        %620 = vdwg.mxu0
        %v621 = vsel %vm596, %v574, 0
        %v623 = vsel %vm596, %v581, 0
        %625 = vmatpush.xpose.msra.mxu0 0.0
        %626 = vmatpush.xpose.msra.mxu0 0.0
        %627 = vmatpush.xpose.msra.mxu0 0.0
        %628 = vmatpush.xpose.msra.mxu0 0.0
        %629 = vmatpush.xpose.msra.mxu0 0.0
        %630 = vmatpush.xpose.msra.mxu0 0.0
        %631 = vmatpush.xpose.msra.mxu0 0.0
        %632 = vmatpush.xpose.msra.mxu0 0.0
        %633 = vmatpush.xpose.msra.mxu0 0.0
        %634 = vmatpush.xpose.msra.mxu0 0.0
        %635 = vmatpush.xpose.msra.mxu0 0.0
        %636 = vmatpush.xpose.msra.mxu0 0.0
        %637 = vmatpush.xpose.msra.mxu0 0.0
        %638 = vmatpush.xpose.msra.mxu0 0.0
        %639 = vmatpush.xpose.msra.mxu0 0.0
        %640 = vmatpush.xpose.msra.mxu0 %v623
        %641 = vmatmul.f32.gmra.mxu0 %v621
        %v642 = vpop.f32.mrf.mxu0
        %v643 = vadd.f32 0.0, %v642
        %644 = vdwg.mxu0
        %v645 = vsel %vm596, %v576, 0
        %v647 = vsel %vm596, %v583, 0
        %649 = vmatpush.xpose.msra.mxu0 0.0
        %650 = vmatpush.xpose.msra.mxu0 0.0
        %651 = vmatpush.xpose.msra.mxu0 0.0
        %652 = vmatpush.xpose.msra.mxu0 0.0
        %653 = vmatpush.xpose.msra.mxu0 0.0
        %654 = vmatpush.xpose.msra.mxu0 0.0
        %655 = vmatpush.xpose.msra.mxu0 0.0
        %656 = vmatpush.xpose.msra.mxu0 0.0
        %657 = vmatpush.xpose.msra.mxu0 0.0
        %658 = vmatpush.xpose.msra.mxu0 0.0
        %659 = vmatpush.xpose.msra.mxu0 0.0
        %660 = vmatpush.xpose.msra.mxu0 0.0
        %661 = vmatpush.xpose.msra.mxu0 0.0
        %662 = vmatpush.xpose.msra.mxu0 0.0
        %663 = vmatpush.xpose.msra.mxu0 0.0
        %664 = vmatpush.xpose.msra.mxu0 %v647
        %665 = vmatmul.f32.gmra.mxu0 %v645
        %v666 = vpop.f32.mrf.mxu0
        %v667 = vadd.f32 0.0, %v666
        %668 = vdwg.mxu0
        %v669 = vsel %vm596, %v578, 0
        %v671 = vsel %vm596, %v585, 0
        %673 = vmatpush.xpose.msra.mxu0 0.0
        %674 = vmatpush.xpose.msra.mxu0 0.0
        %675 = vmatpush.xpose.msra.mxu0 0.0
        %676 = vmatpush.xpose.msra.mxu0 0.0
        %677 = vmatpush.xpose.msra.mxu0 0.0
        %678 = vmatpush.xpose.msra.mxu0 0.0
        %679 = vmatpush.xpose.msra.mxu0 0.0
        %680 = vmatpush.xpose.msra.mxu0 0.0
        %681 = vmatpush.xpose.msra.mxu0 0.0
        %682 = vmatpush.xpose.msra.mxu0 0.0
        %683 = vmatpush.xpose.msra.mxu0 0.0
        %684 = vmatpush.xpose.msra.mxu0 0.0
        %685 = vmatpush.xpose.msra.mxu0 0.0
        %686 = vmatpush.xpose.msra.mxu0 0.0
        %687 = vmatpush.xpose.msra.mxu0 0.0
        %688 = vmatpush.xpose.msra.mxu0 %v671
        %689 = vmatmul.f32.gmra.mxu0 %v669
        %v690 = vpop.f32.mrf.mxu0
        %v691 = vadd.f32 0.0, %v690
        %692 = vdwg.mxu0
        %v693 = vmul.f32 %v619, 0.17677669
        %v694 = vmul.f32 %v643, 0.17677669
        %v695 = vmul.f32 %v667, 0.17677669
        %v696 = vmul.f32 %v691, 0.17677669
        %v697 = vsel %vm596, %v693, -inf
        %698 = vmax.xlane.f32.xlu0 %v697
        %v699 = vpop.xlane.xlu0 %698
        %v700 = vsel %vm596, %v694, -inf
        %701 = vmax.xlane.f32.xlu0 %v700
        %v702 = vpop.xlane.xlu0 %701
        %v703 = vsel %vm596, %v695, -inf
        %704 = vmax.xlane.f32.xlu0 %v703
        %v705 = vpop.xlane.xlu0 %704
        %v706 = vsel %vm596, %v696, -inf
        %707 = vmax.xlane.f32.xlu0 %v706
        %v708 = vpop.xlane.xlu0 %707
        %v709 = vsub.f32 %v693, %v699
        %v710 = vsub.f32 %v694, %v702
        %v711 = vsub.f32 %v695, %v705
        %v712 = vsub.f32 %v696, %v708
        %v713 = vmul.f32 %v709, 1.442695
        %v714 = vpow.pop %v713
        %v715 = vmul.f32 %v710, 1.442695
        %v716 = vpow.pop %v715
        %v717 = vmul.f32 %v711, 1.442695
        %v718 = vpow.pop %v717
        %v719 = vmul.f32 %v712, 1.442695
        %v720 = vpow.pop %v719
        %v721 = vsel %vm596, %v714, 0.0
        %722 = vadd.xlane.f32.xlu0 %v721
        %v723 = vpop.xlane.xlu0 %722
        %v724 = vsel %vm596, %v716, 0.0
        %725 = vadd.xlane.f32.xlu0 %v724
        %v726 = vpop.xlane.xlu0 %725
        %v727 = vsel %vm596, %v718, 0.0
        %728 = vadd.xlane.f32.xlu0 %v727
        %v729 = vpop.xlane.xlu0 %728
        %v730 = vsel %vm596, %v720, 0.0
        %731 = vadd.xlane.f32.xlu0 %v730
        %v732 = vpop.xlane.xlu0 %731
        %v733 = vrcp.pop %v723
        %v734 = vrcp.pop %v726
        %v735 = vrcp.pop %v729
        %v736 = vrcp.pop %v732
        %v737 = vmul.f32 %v714, %v733
        %v738 = vmul.f32 %v716, %v734
        %v739 = vmul.f32 %v718, %v735
        %v740 = vmul.f32 %v720, %v736
        %v742 = vsel %vm596, %v737, 0
        %744 = vmatpush.msra.mxu0 0.0
        %745 = vmatpush.msra.mxu0 0.0
        %746 = vmatpush.msra.mxu0 0.0
        %747 = vmatpush.msra.mxu0 0.0
        %748 = vmatpush.msra.mxu0 0.0
        %749 = vmatpush.msra.mxu0 0.0
        %750 = vmatpush.msra.mxu0 0.0
        %751 = vmatpush.msra.mxu0 0.0
        %752 = vmatpush.msra.mxu0 0.0
        %753 = vmatpush.msra.mxu0 0.0
        %754 = vmatpush.msra.mxu0 0.0
        %755 = vmatpush.msra.mxu0 0.0
        %756 = vmatpush.msra.mxu0 0.0
        %757 = vmatpush.msra.mxu0 0.0
        %758 = vmatpush.msra.mxu0 0.0
        %759 = vmatpush.msra.mxu0 %v570
        %760 = vmatmul.f32.gmra.mxu0 %v742
        %v761 = vpop.f32.mrf.mxu0
        %v762 = vadd.f32 0.0, %v761
        %763 = vdwg.mxu0
        %v765 = vsel %vm596, %v738, 0
        %767 = vmatpush.msra.mxu0 0.0
        %768 = vmatpush.msra.mxu0 0.0
        %769 = vmatpush.msra.mxu0 0.0
        %770 = vmatpush.msra.mxu0 0.0
        %771 = vmatpush.msra.mxu0 0.0
        %772 = vmatpush.msra.mxu0 0.0
        %773 = vmatpush.msra.mxu0 0.0
        %774 = vmatpush.msra.mxu0 0.0
        %775 = vmatpush.msra.mxu0 0.0
        %776 = vmatpush.msra.mxu0 0.0
        %777 = vmatpush.msra.mxu0 0.0
        %778 = vmatpush.msra.mxu0 0.0
        %779 = vmatpush.msra.mxu0 0.0
        %780 = vmatpush.msra.mxu0 0.0
        %781 = vmatpush.msra.mxu0 0.0
        %782 = vmatpush.msra.mxu0 %v588
        %783 = vmatmul.f32.gmra.mxu0 %v765
        %v784 = vpop.f32.mrf.mxu0
        %v785 = vadd.f32 0.0, %v784
        %786 = vdwg.mxu0
        %v788 = vsel %vm596, %v739, 0
        %790 = vmatpush.msra.mxu0 0.0
        %791 = vmatpush.msra.mxu0 0.0
        %792 = vmatpush.msra.mxu0 0.0
        %793 = vmatpush.msra.mxu0 0.0
        %794 = vmatpush.msra.mxu0 0.0
        %795 = vmatpush.msra.mxu0 0.0
        %796 = vmatpush.msra.mxu0 0.0
        %797 = vmatpush.msra.mxu0 0.0
        %798 = vmatpush.msra.mxu0 0.0
        %799 = vmatpush.msra.mxu0 0.0
        %800 = vmatpush.msra.mxu0 0.0
        %801 = vmatpush.msra.mxu0 0.0
        %802 = vmatpush.msra.mxu0 0.0
        %803 = vmatpush.msra.mxu0 0.0
        %804 = vmatpush.msra.mxu0 0.0
        %805 = vmatpush.msra.mxu0 %v591
        %806 = vmatmul.f32.gmra.mxu0 %v788
        %v807 = vpop.f32.mrf.mxu0
        %v808 = vadd.f32 0.0, %v807
        %809 = vdwg.mxu0
        %v811 = vsel %vm596, %v740, 0
        %813 = vmatpush.msra.mxu0 0.0
        %814 = vmatpush.msra.mxu0 0.0
        %815 = vmatpush.msra.mxu0 0.0
        %816 = vmatpush.msra.mxu0 0.0
        %817 = vmatpush.msra.mxu0 0.0
        %818 = vmatpush.msra.mxu0 0.0
        %819 = vmatpush.msra.mxu0 0.0
        %820 = vmatpush.msra.mxu0 0.0
        %821 = vmatpush.msra.mxu0 0.0
        %822 = vmatpush.msra.mxu0 0.0
        %823 = vmatpush.msra.mxu0 0.0
        %824 = vmatpush.msra.mxu0 0.0
        %825 = vmatpush.msra.mxu0 0.0
        %826 = vmatpush.msra.mxu0 0.0
        %827 = vmatpush.msra.mxu0 0.0
        %828 = vmatpush.msra.mxu0 %v594
        %829 = vmatmul.f32.gmra.mxu0 %v811
        %v830 = vpop.f32.mrf.mxu0
        %v831 = vadd.f32 0.0, %v830
        %832 = vdwg.mxu0
        %834 = vrot.lane.b32.xlu0 %v785, 8
        %v835 = vpop.permute.xlu0 %834
        %838 = vrot.lane.b32.xlu0 %v808, 16
        %v839 = vpop.permute.xlu0 %838
        %842 = vrot.lane.b32.xlu0 %v831, 24
        %v843 = vpop.permute.xlu0 %842
        %v845 = vsel %vm596, %v762, %v835
        %vm846 = vcmask 130048
        %v847 = vsel %vm846, %v845, %v839
        %vm848 = vcmask 195584
        %v849 = vsel %vm848, %v847, %v843
        %850 = vst.msk [vmem:[%s474] sm:$0xff] %vm486, %v849
        %s851 = sand.u32 %s243, 1
        %s852 = scalar_lea.sflag [#allocation4], %s851
        %s853 = sand.u32 %s243, 1
        %s854 = smul.addr %s853, 8
        %s855 = scalar_lea.vmem [#allocation13], %s854
        // Predicated region
        $region81: #{tpu_custom_call.1} parent=55 // pred_check
          %p856 = pneg %p253
        $region82: #{tpu_custom_call.1} parent=55 // pred_check_branch
          %858 = sbr.rel (%p856) target = $region84
        $region83: #{tpu_custom_call.1} parent=55 // pred_region
          %860 = vsyncadd %s852, 0
          %s861 = smul.addr %s31, 8
          %s862 = scalar_lea.hbm %s9, %s861
          %s864 = sshll.u32 %s855, 4
          %s865 = int_to_ptr.vmem [resolvable:$true] %s864
          %s866 = sshll.u32 %s862, 4
          %s867 = int_to_ptr.hbm [resolvable:$true] %s866
          %869 = dma.vmem_to_hbm [thread:$0]  %s865, 128, %s867, %s852
        $region84: #{tpu_custom_call.1} parent=55 // pred_fallthru
          _
      $region56: #{tpu_custom_call.1} parent=5 // pred_fallthru
        _
      %p870 = scmp.le.s32.totalorder 2, %s26
      // Predicated region
      $region85: #{tpu_custom_call.1} parent=5 // pred_check
        %p871 = pneg %p870
      $region86: #{tpu_custom_call.1} parent=5 // pred_check_branch
        %873 = sbr.rel (%p871) target = $region88
      $region87: #{tpu_custom_call.1} parent=5 // pred_region
        %s874 = ssub.s32 %s26, 2
        // Predicated region
        $region89: #{tpu_custom_call.1} parent=87 // pred_check
          %p875 = pneg %p259
        $region90: #{tpu_custom_call.1} parent=87 // pred_check_branch
          %877 = sbr.rel (%p875) target = $region92
        $region91: #{tpu_custom_call.1} parent=87 // pred_region
          %s878 = sand.u32 %s244, 1
          %s879 = scalar_lea.sflag [#allocation4], %s878
          %s880 = sand.u32 %s244, 1
          %s881 = smul.addr %s880, 8
          %s882 = scalar_lea.vmem [#allocation13], %s881
          %884 = dma.done %s879, 128
        $region92: #{tpu_custom_call.1} parent=87 // pred_fallthru
          _
      $region88: #{tpu_custom_call.1} parent=5 // pred_fallthru
        _
    $region6: #{tpu_custom_call.1} parent=1 // loop_footer
      %s30 = sadd.s32 1, %s26
    $region7: #{tpu_custom_call.1} parent=1 // loop_footer_branch
      %25 = sbr.rel target = $region3
    $region8: #{tpu_custom_call.1} parent=1 // loop_exit
      _
    %885 = vsyncpa [#allocation3], 1
    %s886 = scalar_lea.sflag [#allocation3], 1
    %887 = vsyncpa %s886, 1
    %888 = vsyncpa [#allocation6], 1
    %s889 = scalar_lea.sflag [#allocation6], 1
    %890 = vsyncpa %s889, 1
    %891 = vsyncpa [#allocation9], 1
    %892 = vsyncpa [#allocation12], 1
    %893 = vsyncpa [#allocation4], 1
    %s894 = scalar_lea.sflag [#allocation4], 1
    %895 = vsyncpa %s894, 1

</llo_original>
